<compile_context>
chip_gen: v7x
topology: tpu7x:2x2x1
jax: 0.10.0
libtpu: 0.0.40
codegen_flags: <defaults>
</compile_context>

<pallas_src>
import jax
import jax.numpy as jnp
from jax.experimental import pallas as pl
from jax.experimental.pallas import tpu as pltpu

_LANE = 128


def _round_up(n, m):
    return ((n + m - 1) // m) * m


# ---------------------------------------------------------------------------
# Kernel
# ---------------------------------------------------------------------------
def nesp_kernel(x_ref, w1_ref, b1_ref, w2_ref, b2_ref, w3_ref, b3_ref, o_ref):
    # x_ref: (TB, K) f32 batch tile.  Weights/biases: whole (pre-padded)
    # matrices, VMEM-resident across all grid steps (constant index_map).
    w1 = w1_ref[...]
    mxu_dtype = w1.dtype

    # In-kernel cast of the f32 x tile to the MXU operand dtype (free VPU work
    # hidden under the MXU; avoids a wrapper-side HBM pass over x).
    x = x_ref[...].astype(mxu_dtype)

    # fc1 + ReLU (MXU matmul, f32 accumulation; bias add + ReLU in f32 on VPU)
    h1 = jnp.dot(x, w1, preferred_element_type=jnp.float32)
    h1 = jnp.maximum(h1 + b1_ref[...], 0.0)

    # fc2 + ReLU
    h2 = jnp.dot(h1.astype(mxu_dtype), w2_ref[...],
                 preferred_element_type=jnp.float32)
    h2 = jnp.maximum(h2 + b2_ref[...], 0.0)

    # out (no activation)
    y = jnp.dot(h2.astype(mxu_dtype), w3_ref[...],
                preferred_element_type=jnp.float32)
    o_ref[...] = (y + b3_ref[...]).astype(o_ref.dtype)


# ---------------------------------------------------------------------------
# One-time parameter preparation (hoisted out of the per-call path)
# ---------------------------------------------------------------------------
def prepare_params(params, *, mxu_dtype=jnp.bfloat16):
    """Pad hidden dims to lane multiples and pre-cast to the MXU dtype ONCE.

    Padding scheme (all zero padding, mathematically inert through bias add
    and ReLU):
      w1: (k,  h1p)  -- pad output columns only (x's k is NOT padded)
      w2: (h1p, h2p) -- pad rows to match padded h1, pad output columns
      w3: (h2p, outn)-- pad rows to match padded h2; output dim NOT padded
    Returns (padded_param_dict, real_dims=(k, h1n, h2n, outn)).
    """
    w1, b1 = params["w1"], params["b1"]
    w2, b2 = params["w2"], params["b2"]
    w3, b3 = params["w3"], params["b3"]

    k, h1n = w1.shape
    h2n = w2.shape[1]
    outn = w3.shape[1]
    h1p = _round_up(h1n, _LANE)
    h2p = _round_up(h2n, _LANE)

    prepared = dict(
        w1=jnp.pad(w1, ((0, 0), (0, h1p - h1n))).astype(mxu_dtype),
        b1=jnp.pad(b1, ((0, 0), (0, h1p - h1n))).astype(jnp.float32),
        w2=jnp.pad(w2, ((0, h1p - h1n), (0, h2p - h2n))).astype(mxu_dtype),
        b2=jnp.pad(b2, ((0, 0), (0, h2p - h2n))).astype(jnp.float32),
        w3=jnp.pad(w3, ((0, h2p - h2n), (0, 0))).astype(mxu_dtype),
        b3=b3.astype(jnp.float32),
    )
    return prepared, (k, h1n, h2n, outn)


def _choose_batch_tile(batch, block_batch, row_align):
    """Tile rows: aligned to row_align, <= block_batch, and capped at
    ceil(batch/2) so large batches always produce >= 2 grid steps (v7x 2 TCs)."""
    half = _round_up(pl.cdiv(batch, 2), row_align)
    tb = min(_round_up(block_batch, row_align), max(row_align, half))
    bp = _round_up(batch, tb)
    return tb, bp


# ---------------------------------------------------------------------------
# Forward
# ---------------------------------------------------------------------------
def nesp_forward(x, prepared, real_dims=None, *, block_batch=1024):
    """Fused 3-layer MLP forward.

    x: (batch, k) float32.
    prepared: output of prepare_params (pre-padded, pre-cast weights/biases).
    real_dims: (k, h1n, h2n, outn) unpadded dims for the advisory cost model.
    """
    w1, b1 = prepared["w1"], prepared["b1"]
    w2, b2 = prepared["w2"], prepared["b2"]
    w3, b3 = prepared["w3"], prepared["b3"]

    batch, k = x.shape
    kw, h1p = w1.shape
    h2p = w2.shape[1]
    outn = w3.shape[1]
    assert kw == k, "x feature dim must match w1 rows"

    if real_dims is None:
        real_dims = (k, h1p, h2p, outn)
    rk, rh1, rh2, rout = real_dims

    mxu_dtype = w1.dtype
    row_align = 16 if mxu_dtype == jnp.bfloat16 else 8
    tb, bp = _choose_batch_tile(batch, block_batch, row_align)

    # Only batch-row padding is needed; columns stay at the real k.
    xp = jnp.pad(x, ((0, bp - batch), (0, 0))) if bp != batch else x

    grid = (bp // tb,)

    # Advisory cost model from REAL dims (padded dims would overstate FLOPs).
    w_itemsize = jnp.dtype(mxu_dtype).itemsize
    flops = 2 * batch * (rk * rh1 + rh1 * rh2 + rh2 * rout)
    bytes_accessed = (
        batch * rk * 4                                        # x (f32)
        + (rk * rh1 + rh1 * rh2 + rh2 * rout) * w_itemsize    # weights
        + (rh1 + rh2 + rout) * 4                              # biases (f32)
        + batch * rout * 4                                    # output (f32)
    )

    batch_tile = lambda i: (i, 0)   # tiles along the batch grid axis
    resident = lambda i: (0, 0)     # constant block -> stays in VMEM

    out_padded = pl.pallas_call(
        nesp_kernel,
        out_shape=jax.ShapeDtypeStruct((bp, outn), jnp.float32),
        grid=grid,
        in_specs=[
            pl.BlockSpec((tb, k), batch_tile),      # k == full dim -> legal
            pl.BlockSpec((k, h1p), resident),
            pl.BlockSpec((1, h1p), resident),
            pl.BlockSpec((h1p, h2p), resident),
            pl.BlockSpec((1, h2p), resident),
            pl.BlockSpec((h2p, outn), resident),    # outn == full dim -> legal
            pl.BlockSpec((1, outn), resident),
        ],
        out_specs=pl.BlockSpec((tb, outn), batch_tile),
        compiler_params=pltpu.CompilerParams(
            dimension_semantics=("parallel",),
        ),
        cost_estimate=pl.CostEstimate(
            flops=flops, transcendentals=0, bytes_accessed=bytes_accessed),
    )(xp, w1, b1, w2, b2, w3, b3)

    # Strip batch padding -> exact module output shape (no feature padding).
    return out_padded[:batch] if bp != batch else out_padded


# ---------------------------------------------------------------------------
# Init / reference
# ---------------------------------------------------------------------------
def init_params(key, input_features, output_features, h1_nodes, h2_nodes):
    """Deterministic init mimicking nn.Linear's U(-1/sqrt(fan_in), 1/sqrt(fan_in)).
    Weights stored transposed: (in, out)."""
    ks = jax.random.split(key, 6)

    def linear(kw, kb, fan_in, fan_out):
        bound = 1.0 / jnp.sqrt(fan_in)
        w = jax.random.uniform(kw, (fan_in, fan_out), jnp.float32, -bound, bound)
        b = jax.random.uniform(kb, (1, fan_out), jnp.float32, -bound, bound)
        return w, b

    w1, b1 = linear(ks[0], ks[1], input_features, h1_nodes)
    w2, b2 = linear(ks[2], ks[3], h1_nodes, h2_nodes)
    w3, b3 = linear(ks[4], ks[5], h2_nodes, output_features)
    return dict(w1=w1, b1=b1, w2=w2, b2=b2, w3=w3, b3=b3)


def nesp_reference(x, p, mxu_dtype=jnp.float32):
    """Pure-JAX reference with the same MXU operand dtype / f32 accumulation."""
    c = lambda a: a.astype(mxu_dtype)
    h1 = jnp.maximum(
        jnp.dot(c(x), c(p["w1"]), preferred_element_type=jnp.float32) + p["b1"], 0.0)
    h2 = jnp.maximum(
        jnp.dot(c(h1), c(p["w2"]), preferred_element_type=jnp.float32) + p["b2"], 0.0)
    return jnp.dot(c(h2), c(p["w3"]), preferred_element_type=jnp.float32) + p["b3"]


# ---------------------------------------------------------------------------
if __name__ == "__main__":
    # Small shapes consistent with the module's forward.
    batch = 8
    input_features = 16
    h1_nodes = 32
    h2_nodes = 32
    output_features = 8

    key = jax.random.PRNGKey(0)
    kx, kprm = jax.random.split(key)
    x = jax.random.normal(kx, (batch, input_features), jnp.float32)
    params = init_params(kprm, input_features, output_features, h1_nodes, h2_nodes)

    # 1) Exact-precision path (f32 MXU operands) — matches PyTorch f32 forward.
    prep_f32, dims = prepare_params(params, mxu_dtype=jnp.float32)
    y_f32 = jax.block_until_ready(nesp_forward(x, prep_f32, dims))
    y_ref = nesp_reference(x, params, jnp.float32)
    assert y_f32.shape == (batch, output_features)
    assert jnp.allclose(y_f32, y_ref, atol=1e-4, rtol=1e-4), "f32 mismatch vs reference"

    # 2) Default bf16-MXU / f32-accumulation path on a larger batch to exercise
    #    the multi-step pipelined batch grid (grid=(4,) with 256-row tiles;
    #    >= 2 steps so v7x can shard across both TensorCores).
    prep_bf16, dims = prepare_params(params, mxu_dtype=jnp.bfloat16)
    big_batch = 1024
    xb = jax.random.normal(jax.random.PRNGKey(1), (big_batch, input_features),
                           jnp.float32)
    y_bf16 = jax.block_until_ready(
        nesp_forward(xb, prep_bf16, dims, block_batch=256))
    y_bref = nesp_reference(xb, params, jnp.bfloat16)
    assert y_bf16.shape == (big_batch, output_features)
    assert jnp.allclose(y_bf16, y_bref, atol=1e-2, rtol=1e-2), "bf16 mismatch vs reference"

    print("KERNEL_OK")
</pallas_src>

<mosaic_0001>
module attributes {stable_mosaic.version = 11 : i64} {
  func.func @nesp_kernel(%arg0: i32, %arg1: memref<8x16xf32, #tpu.memory_space<vmem>>, %arg2: memref<16x128xf32, #tpu.memory_space<vmem>>, %arg3: memref<1x128xf32, #tpu.memory_space<vmem>>, %arg4: memref<128x128xf32, #tpu.memory_space<vmem>>, %arg5: memref<1x128xf32, #tpu.memory_space<vmem>>, %arg6: memref<128x8xf32, #tpu.memory_space<vmem>>, %arg7: memref<1x8xf32, #tpu.memory_space<vmem>>, %arg8: memref<8x8xf32, #tpu.memory_space<vmem>>) attributes {dimension_semantics = [#tpu.dimension_semantics<parallel>], iteration_bounds = array<i64: 1>, scalar_prefetch = 0 : i64, scratch_operands = 0 : i64, tpu.core_type = #tpu.core_type<tc>, window_params = [{transform_indices = @transform_0, window_bounds = array<i64: 8, 16>}, {pipeline_mode = #tpu.pipeline_mode<synchronous>, transform_indices = @transform_1, window_bounds = array<i64: 16, 128>}, {pipeline_mode = #tpu.pipeline_mode<synchronous>, transform_indices = @transform_2, window_bounds = array<i64: 1, 128>}, {pipeline_mode = #tpu.pipeline_mode<synchronous>, transform_indices = @transform_3, window_bounds = array<i64: 128, 128>}, {pipeline_mode = #tpu.pipeline_mode<synchronous>, transform_indices = @transform_4, window_bounds = array<i64: 1, 128>}, {pipeline_mode = #tpu.pipeline_mode<synchronous>, transform_indices = @transform_5, window_bounds = array<i64: 128, 8>}, {pipeline_mode = #tpu.pipeline_mode<synchronous>, transform_indices = @transform_6, window_bounds = array<i64: 1, 8>}, {transform_indices = @transform_7, window_bounds = array<i64: 8, 8>}]} {
    %c0 = arith.constant 0 : index
    %c0_0 = arith.constant 0 : index
    %0 = vector.load %arg2[%c0, %c0_0] : memref<16x128xf32, #tpu.memory_space<vmem>>, vector<16x128xf32>
    %c0_1 = arith.constant 0 : index
    %c0_2 = arith.constant 0 : index
    %1 = vector.load %arg1[%c0_1, %c0_2] : memref<8x16xf32, #tpu.memory_space<vmem>>, vector<8x16xf32>
    %cst = arith.constant dense<0.000000e+00> : vector<8x128xf32>
    %2 = tpu.matmul %1, %0, %cst {dimension_numbers = #tpu.dot_dimension_numbers<[1], [0], [0], [1], [0, 0, 1, 1], [], []>} : vector<8x16xf32>, vector<16x128xf32>, vector<8x128xf32> -> vector<8x128xf32>
    %c0_3 = arith.constant 0 : index
    %c0_4 = arith.constant 0 : index
    %3 = vector.load %arg3[%c0_3, %c0_4] : memref<1x128xf32, #tpu.memory_space<vmem>>, vector<1x128xf32>
    %4 = vector.broadcast %3 : vector<1x128xf32> to vector<8x128xf32>
    %5 = arith.addf %2, %4 : vector<8x128xf32>
    %cst_5 = arith.constant 0.000000e+00 : f32
    %6 = vector.broadcast %cst_5 : f32 to vector<8x128xf32>
    %7 = arith.maximumf %5, %6 : vector<8x128xf32>
    %c0_6 = arith.constant 0 : index
    %c0_7 = arith.constant 0 : index
    %8 = vector.load %arg4[%c0_6, %c0_7] : memref<128x128xf32, #tpu.memory_space<vmem>>, vector<128x128xf32>
    %cst_8 = arith.constant dense<0.000000e+00> : vector<8x128xf32>
    %9 = tpu.matmul %7, %8, %cst_8 {dimension_numbers = #tpu.dot_dimension_numbers<[1], [0], [0], [1], [0, 0, 1, 1], [], []>} : vector<8x128xf32>, vector<128x128xf32>, vector<8x128xf32> -> vector<8x128xf32>
    %c0_9 = arith.constant 0 : index
    %c0_10 = arith.constant 0 : index
    %10 = vector.load %arg5[%c0_9, %c0_10] : memref<1x128xf32, #tpu.memory_space<vmem>>, vector<1x128xf32>
    %11 = vector.broadcast %10 : vector<1x128xf32> to vector<8x128xf32>
    %12 = arith.addf %9, %11 : vector<8x128xf32>
    %cst_11 = arith.constant 0.000000e+00 : f32
    %13 = vector.broadcast %cst_11 : f32 to vector<8x128xf32>
    %14 = arith.maximumf %12, %13 : vector<8x128xf32>
    %c0_12 = arith.constant 0 : index
    %c0_13 = arith.constant 0 : index
    %15 = vector.load %arg6[%c0_12, %c0_13] : memref<128x8xf32, #tpu.memory_space<vmem>>, vector<128x8xf32>
    %cst_14 = arith.constant dense<0.000000e+00> : vector<8x8xf32>
    %16 = tpu.matmul %14, %15, %cst_14 {dimension_numbers = #tpu.dot_dimension_numbers<[1], [0], [0], [1], [0, 0, 1, 1], [], []>} : vector<8x128xf32>, vector<128x8xf32>, vector<8x8xf32> -> vector<8x8xf32>
    %c0_15 = arith.constant 0 : index
    %c0_16 = arith.constant 0 : index
    %17 = vector.load %arg7[%c0_15, %c0_16] : memref<1x8xf32, #tpu.memory_space<vmem>>, vector<1x8xf32>
    %18 = vector.broadcast %17 : vector<1x8xf32> to vector<8x8xf32>
    %19 = arith.addf %16, %18 : vector<8x8xf32>
    %c0_17 = arith.constant 0 : index
    %c0_18 = arith.constant 0 : index
    %20 = vector.load %arg8[%c0_17, %c0_18] : memref<8x8xf32, #tpu.memory_space<vmem>>, vector<8x8xf32>
    tpu.vector_store %arg8[%c0_17, %c0_18], %19 {strides = array<i32>} : memref<8x8xf32, #tpu.memory_space<vmem>>, vector<8x8xf32>,
    return
  }
  func.func @transform_0(%arg0: i32) -> (i32, i32) {
    %c0_i32 = arith.constant 0 : i32
    %c0_i32_0 = arith.constant 0 : i32
    return %arg0, %c0_i32 : i32, i32
  }
  func.func @transform_1(%arg0: i32) -> (i32, i32) {
    %c0_i32 = arith.constant 0 : i32
    %c0_i32_0 = arith.constant 0 : i32
    %c0_i32_1 = arith.constant 0 : i32
    return %c0_i32, %c0_i32_0 : i32, i32
  }
  func.func @transform_2(%arg0: i32) -> (i32, i32) {
    %c0_i32 = arith.constant 0 : i32
    %c0_i32_0 = arith.constant 0 : i32
    %c0_i32_1 = arith.constant 0 : i32
    return %c0_i32, %c0_i32_0 : i32, i32
  }
  func.func @transform_3(%arg0: i32) -> (i32, i32) {
    %c0_i32 = arith.constant 0 : i32
    %c0_i32_0 = arith.constant 0 : i32
    %c0_i32_1 = arith.constant 0 : i32
    return %c0_i32, %c0_i32_0 : i32, i32
  }
  func.func @transform_4(%arg0: i32) -> (i32, i32) {
    %c0_i32 = arith.constant 0 : i32
    %c0_i32_0 = arith.constant 0 : i32
    %c0_i32_1 = arith.constant 0 : i32
    return %c0_i32, %c0_i32_0 : i32, i32
  }
  func.func @transform_5(%arg0: i32) -> (i32, i32) {
    %c0_i32 = arith.constant 0 : i32
    %c0_i32_0 = arith.constant 0 : i32
    %c0_i32_1 = arith.constant 0 : i32
    return %c0_i32, %c0_i32_0 : i32, i32
  }
  func.func @transform_6(%arg0: i32) -> (i32, i32) {
    %c0_i32 = arith.constant 0 : i32
    %c0_i32_0 = arith.constant 0 : i32
    %c0_i32_1 = arith.constant 0 : i32
    return %c0_i32, %c0_i32_0 : i32, i32
  }
  func.func @transform_7(%arg0: i32) -> (i32, i32) {
    %c0_i32 = arith.constant 0 : i32
    %c0_i32_0 = arith.constant 0 : i32
    return %arg0, %c0_i32 : i32, i32
  }
}

</mosaic_0001>

<llo_original>
// kernel: tpu_custom_call.1
$region0: #{tpu_custom_call.1}
  #allocation0 [shape = 'u32[]', space=smem, size = 0x4, offset = 0x4, fixed_abs, tag = 'smem constant byte address 0x4 - core index']
  #allocation1 [shape = 'u32[144,128]{1,0:T(1,128)}', space=vmem, size = 0x12000, scoped, tag = 'internal scratch']
  %s0 = inlined_call_operand.hbm [shape: f32[8,16], index: 0, kind: input, shape index: {}]
  %s1 = inlined_call_operand.vmem [shape: f32[16,128], index: 1, kind: input, shape index: {}]
  %s2 = inlined_call_operand.vmem [shape: f32[1,128], index: 2, kind: input, shape index: {}]
  %s3 = inlined_call_operand.vmem [shape: f32[128,128], index: 3, kind: input, shape index: {}]
  %s4 = inlined_call_operand.vmem [shape: f32[1,128], index: 4, kind: input, shape index: {}]
  %s5 = inlined_call_operand.vmem [shape: f32[128,8], index: 5, kind: input, shape index: {}]
  %s6 = inlined_call_operand.vmem [shape: f32[1,8], index: 6, kind: input, shape index: {}]
  %s7 = inlined_call_operand.hbm [shape: f32[8,8], index: 7, kind: output, shape index: {}]
  %s8 = sld [smem:[#allocation0]]
  $region42: #{tpu_custom_call.1} parent=0
    _
  %s10 = ssub.s32 1, %s8
  %s11 = scalar_select 0, %s10, %s8
  $region1: #{tpu_custom_call.1} parent=0
    #allocation2 [shape = 'u8[4096]{0}', space=vmem, size = 0x1000, scoped, tag = 'input window, operand 0, single buffered']
    #allocation3 [shape = 's32[1]{0}', space=sflag, size = 0x4, scoped, tag = 'scoped memory for tpu_custom_call.1']
    #allocation4 [shape = 's32[1]{0}', space=sflag, size = 0x4, scoped, tag = 'scoped memory for tpu_custom_call.1']
    #allocation5 [shape = 'u8[4096]{0}', space=vmem, size = 0x1000, scoped, tag = 'output window, operand 0, single buffered']
    %12 = vsyncpa [#allocation3], 0
    %13 = vsyncpa [#allocation4], 0
    // Predicated region
    $region2: #{tpu_custom_call.1} parent=1 // pred_check
      _
    $region3: #{tpu_custom_call.1} parent=1 // pred_check_branch
      %15 = sbr.rel (0) target = $region5
    $region4: #{tpu_custom_call.1} parent=1 // pred_region
      %s17 = ssub.s32 128, 128
      %18 = vsyncadd [#allocation3], %s17
      %s20 = sshll.u32 [#allocation2], 4
      %s21 = int_to_ptr.vmem [resolvable:$true] %s20
      %23 = dma.hbm_to_vmem [thread:$0]  %s0, 128, %s21, [#allocation3]
    $region5: #{tpu_custom_call.1} parent=1 // pred_fallthru
      _
    // Predicated region
    $region6: #{tpu_custom_call.1} parent=1 // pred_check
      _
    $region7: #{tpu_custom_call.1} parent=1 // pred_check_branch
      %25 = sbr.rel (0) target = $region9
    $region8: #{tpu_custom_call.1} parent=1 // pred_region
      _
    $region9: #{tpu_custom_call.1} parent=1 // pred_fallthru
      _
    // Predicated region
    $region10: #{tpu_custom_call.1} parent=1 // pred_check
      _
    $region11: #{tpu_custom_call.1} parent=1 // pred_check_branch
      %27 = sbr.rel (0) target = $region13
    $region12: #{tpu_custom_call.1} parent=1 // pred_region
      _
    $region13: #{tpu_custom_call.1} parent=1 // pred_fallthru
      _
    // Predicated region
    $region14: #{tpu_custom_call.1} parent=1 // pred_check
      _
    $region15: #{tpu_custom_call.1} parent=1 // pred_check_branch
      %29 = sbr.rel (0) target = $region17
    $region16: #{tpu_custom_call.1} parent=1 // pred_region
      _
    $region17: #{tpu_custom_call.1} parent=1 // pred_fallthru
      _
    // Predicated region
    $region18: #{tpu_custom_call.1} parent=1 // pred_check
      _
    $region19: #{tpu_custom_call.1} parent=1 // pred_check_branch
      %31 = sbr.rel (0) target = $region21
    $region20: #{tpu_custom_call.1} parent=1 // pred_region
      _
    $region21: #{tpu_custom_call.1} parent=1 // pred_fallthru
      _
    // Predicated region
    $region22: #{tpu_custom_call.1} parent=1 // pred_check
      _
    $region23: #{tpu_custom_call.1} parent=1 // pred_check_branch
      %33 = sbr.rel (0) target = $region25
    $region24: #{tpu_custom_call.1} parent=1 // pred_region
      _
    $region25: #{tpu_custom_call.1} parent=1 // pred_fallthru
      _
    // Predicated region
    $region26: #{tpu_custom_call.1} parent=1 // pred_check
      _
    $region27: #{tpu_custom_call.1} parent=1 // pred_check_branch
      %35 = sbr.rel (0) target = $region29
    $region28: #{tpu_custom_call.1} parent=1 // pred_region
      _
    $region29: #{tpu_custom_call.1} parent=1 // pred_fallthru
      _
    // Predicated region
    $region30: #{tpu_custom_call.1} parent=1 // pred_check
      _
    $region31: #{tpu_custom_call.1} parent=1 // pred_check_branch
      %37 = sbr.rel (0) target = $region33
    $region32: #{tpu_custom_call.1} parent=1 // pred_region
      %38 = dma.done [#allocation3], 128
    $region33: #{tpu_custom_call.1} parent=1 // pred_fallthru
      _
    %v39 = vld [vmem:[%s1] sm:$0xff]
    %v40 = vld [vmem:[%s1 + $0x8] sm:$0xff]
    %v41 = vld [vmem:[#allocation2] sm:$0xff]
    %v42 = vld [vmem:[%s2] sm:$0x1]
    %v44 = vlaneseq
    %v45 = vshrl.u32 %v44, 7
    %v46 = vsub.s32 0, %v45
    %v47 = vrot.slane %v42, %v46
    %vm49 = vcmask 130048
    %v51 = vsel %vm49, %v41, 0
    %53 = vmatprep.subr.mxu0 0.0
    %54 = vmatpush1.msra.mxu0 %v39
    %55 = vmatprep.subr.mxu0 0.0
    %56 = vmatpush1.msra.mxu0 %v40
    %57 = vmatprep.subr.mxu0 0.0
    %58 = vmatpush1.msra.mxu0 0.0
    %59 = vmatprep.subr.mxu0 0.0
    %60 = vmatpush1.msra.mxu0 0.0
    %61 = vmatprep.subr.mxu0 0.0
    %62 = vmatpush1.msra.mxu0 0.0
    %63 = vmatprep.subr.mxu0 0.0
    %64 = vmatpush1.msra.mxu0 0.0
    %65 = vmatprep.subr.mxu0 0.0
    %66 = vmatpush1.msra.mxu0 0.0
    %67 = vmatprep.subr.mxu0 0.0
    %68 = vmatpush1.msra.mxu0 0.0
    %69 = vmatprep.subr.mxu0 0.0
    %70 = vmatpush1.msra.mxu0 0.0
    %71 = vmatprep.subr.mxu0 0.0
    %72 = vmatpush1.msra.mxu0 0.0
    %73 = vmatprep.subr.mxu0 0.0
    %74 = vmatpush1.msra.mxu0 0.0
    %75 = vmatprep.subr.mxu0 0.0
    %76 = vmatpush1.msra.mxu0 0.0
    %77 = vmatprep.subr.mxu0 0.0
    %78 = vmatpush1.msra.mxu0 0.0
    %79 = vmatprep.subr.mxu0 0.0
    %80 = vmatpush1.msra.mxu0 0.0
    %81 = vmatprep.subr.mxu0 0.0
    %82 = vmatpush1.msra.mxu0 0.0
    %83 = vmatprep.subr.mxu0 0.0
    %84 = vmatpush1.msra.mxu0 0.0
    %85 = vmatprep.subr.mxu0 0.0
    %86 = vmatpush1.msra.mxu0 0.0
    %87 = vmatprep.subr.mxu0 0.0
    %88 = vmatpush1.msra.mxu0 0.0
    %89 = vmatprep.subr.mxu0 0.0
    %90 = vmatpush1.msra.mxu0 0.0
    %91 = vmatprep.subr.mxu0 0.0
    %92 = vmatpush1.msra.mxu0 0.0
    %93 = vmatprep.subr.mxu0 0.0
    %94 = vmatpush1.msra.mxu0 0.0
    %95 = vmatprep.subr.mxu0 0.0
    %96 = vmatpush1.msra.mxu0 0.0
    %97 = vmatprep.subr.mxu0 0.0
    %98 = vmatpush1.msra.mxu0 0.0
    %99 = vmatprep.subr.mxu0 0.0
    %100 = vmatpush1.msra.mxu0 0.0
    %101 = vmatprep.subr.mxu0 0.0
    %102 = vmatpush1.msra.mxu0 0.0
    %103 = vmatprep.subr.mxu0 0.0
    %104 = vmatpush1.msra.mxu0 0.0
    %105 = vmatprep.subr.mxu0 0.0
    %106 = vmatpush1.msra.mxu0 0.0
    %107 = vmatprep.subr.mxu0 0.0
    %108 = vmatpush1.msra.mxu0 0.0
    %109 = vmatprep.subr.mxu0 0.0
    %110 = vmatpush1.msra.mxu0 0.0
    %111 = vmatprep.subr.mxu0 0.0
    %112 = vmatpush1.msra.mxu0 0.0
    %113 = vmatprep.subr.mxu0 0.0
    %114 = vmatpush1.msra.mxu0 0.0
    %115 = vmatprep.subr.mxu0 0.0
    %116 = vmatpush1.msra.mxu0 0.0
    %117 = vmatprep.mubr.f32.mxu0 0.0
    %118 = vmatmul.mubr.f32.gmra.mrb[0].mxu0 %v51
    %v119 = vpop.f32.mrb[0].mxu0
    %v120 = vadd.f32 %v47, %v119
    %v121 = vpop.f32.mrb[0].mxu0
    %122 = vdwg.mxu0
    %v123 = vmax.f32 %v120, 0.0
    %v124 = vld [vmem:[%s3] sm:$0xff]
    %v125 = vld [vmem:[%s3 + $0x8] sm:$0xff]
    %v126 = vld [vmem:[%s3 + $0x10] sm:$0xff]
    %v127 = vld [vmem:[%s3 + $0x18] sm:$0xff]
    %v128 = vld [vmem:[%s3 + $0x20] sm:$0xff]
    %v129 = vld [vmem:[%s3 + $0x28] sm:$0xff]
    %v130 = vld [vmem:[%s3 + $0x30] sm:$0xff]
    %v131 = vld [vmem:[%s3 + $0x38] sm:$0xff]
    %v132 = vld [vmem:[%s3 + $0x40] sm:$0xff]
    %v133 = vld [vmem:[%s3 + $0x48] sm:$0xff]
    %v134 = vld [vmem:[%s3 + $0x50] sm:$0xff]
    %v135 = vld [vmem:[%s3 + $0x58] sm:$0xff]
    %v136 = vld [vmem:[%s3 + $0x60] sm:$0xff]
    %v137 = vld [vmem:[%s3 + $0x68] sm:$0xff]
    %v138 = vld [vmem:[%s3 + $0x70] sm:$0xff]
    %v139 = vld [vmem:[%s3 + $0x78] sm:$0xff]
    %v140 = vld [vmem:[%s4] sm:$0x1]
    %v142 = vlaneseq
    %v143 = vshrl.u32 %v142, 7
    %v144 = vsub.s32 0, %v143
    %v145 = vrot.slane %v140, %v144
    %147 = vmatprep.subr.mxu0 0.0
    %148 = vmatpush1.msra.mxu0 %v124
    %149 = vmatprep.subr.mxu0 0.0
    %150 = vmatpush1.msra.mxu0 %v125
    %151 = vmatprep.subr.mxu0 0.0
    %152 = vmatpush1.msra.mxu0 %v126
    %153 = vmatprep.subr.mxu0 0.0
    %154 = vmatpush1.msra.mxu0 %v127
    %155 = vmatprep.subr.mxu0 0.0
    %156 = vmatpush1.msra.mxu0 %v128
    %157 = vmatprep.subr.mxu0 0.0
    %158 = vmatpush1.msra.mxu0 %v129
    %159 = vmatprep.subr.mxu0 0.0
    %160 = vmatpush1.msra.mxu0 %v130
    %161 = vmatprep.subr.mxu0 0.0
    %162 = vmatpush1.msra.mxu0 %v131
    %163 = vmatprep.subr.mxu0 0.0
    %164 = vmatpush1.msra.mxu0 %v132
    %165 = vmatprep.subr.mxu0 0.0
    %166 = vmatpush1.msra.mxu0 %v133
    %167 = vmatprep.subr.mxu0 0.0
    %168 = vmatpush1.msra.mxu0 %v134
    %169 = vmatprep.subr.mxu0 0.0
    %170 = vmatpush1.msra.mxu0 %v135
    %171 = vmatprep.subr.mxu0 0.0
    %172 = vmatpush1.msra.mxu0 %v136
    %173 = vmatprep.subr.mxu0 0.0
    %174 = vmatpush1.msra.mxu0 %v137
    %175 = vmatprep.subr.mxu0 0.0
    %176 = vmatpush1.msra.mxu0 %v138
    %177 = vmatprep.subr.mxu0 0.0
    %178 = vmatpush1.msra.mxu0 %v139
    %179 = vmatprep.subr.mxu0 0.0
    %180 = vmatpush1.msra.mxu0 0.0
    %181 = vmatprep.subr.mxu0 0.0
    %182 = vmatpush1.msra.mxu0 0.0
    %183 = vmatprep.subr.mxu0 0.0
    %184 = vmatpush1.msra.mxu0 0.0
    %185 = vmatprep.subr.mxu0 0.0
    %186 = vmatpush1.msra.mxu0 0.0
    %187 = vmatprep.subr.mxu0 0.0
    %188 = vmatpush1.msra.mxu0 0.0
    %189 = vmatprep.subr.mxu0 0.0
    %190 = vmatpush1.msra.mxu0 0.0
    %191 = vmatprep.subr.mxu0 0.0
    %192 = vmatpush1.msra.mxu0 0.0
    %193 = vmatprep.subr.mxu0 0.0
    %194 = vmatpush1.msra.mxu0 0.0
    %195 = vmatprep.subr.mxu0 0.0
    %196 = vmatpush1.msra.mxu0 0.0
    %197 = vmatprep.subr.mxu0 0.0
    %198 = vmatpush1.msra.mxu0 0.0
    %199 = vmatprep.subr.mxu0 0.0
    %200 = vmatpush1.msra.mxu0 0.0
    %201 = vmatprep.subr.mxu0 0.0
    %202 = vmatpush1.msra.mxu0 0.0
    %203 = vmatprep.subr.mxu0 0.0
    %204 = vmatpush1.msra.mxu0 0.0
    %205 = vmatprep.subr.mxu0 0.0
    %206 = vmatpush1.msra.mxu0 0.0
    %207 = vmatprep.subr.mxu0 0.0
    %208 = vmatpush1.msra.mxu0 0.0
    %209 = vmatprep.subr.mxu0 0.0
    %210 = vmatpush1.msra.mxu0 0.0
    %211 = vmatprep.mubr.f32.mxu0 0.0
    %212 = vmatmul.mubr.f32.gmra.mrb[0].mxu0 %v123
    %v213 = vpop.f32.mrb[0].mxu0
    %v214 = vadd.f32 %v145, %v213
    %v215 = vpop.f32.mrb[0].mxu0
    %216 = vdwg.mxu0
    %v217 = vmax.f32 %v214, 0.0
    %v218 = vld [vmem:[%s5] sm:$0xff]
    %v219 = vld [vmem:[%s5 + $0x8] sm:$0xff]
    %v220 = vld [vmem:[%s5 + $0x10] sm:$0xff]
    %v221 = vld [vmem:[%s5 + $0x18] sm:$0xff]
    %v222 = vld [vmem:[%s5 + $0x20] sm:$0xff]
    %v223 = vld [vmem:[%s5 + $0x28] sm:$0xff]
    %v224 = vld [vmem:[%s5 + $0x30] sm:$0xff]
    %v225 = vld [vmem:[%s5 + $0x38] sm:$0xff]
    %v226 = vld [vmem:[%s5 + $0x40] sm:$0xff]
    %v227 = vld [vmem:[%s5 + $0x48] sm:$0xff]
    %v228 = vld [vmem:[%s5 + $0x50] sm:$0xff]
    %v229 = vld [vmem:[%s5 + $0x58] sm:$0xff]
    %v230 = vld [vmem:[%s5 + $0x60] sm:$0xff]
    %v231 = vld [vmem:[%s5 + $0x68] sm:$0xff]
    %v232 = vld [vmem:[%s5 + $0x70] sm:$0xff]
    %v233 = vld [vmem:[%s5 + $0x78] sm:$0xff]
    %v234 = vld [vmem:[%s6] sm:$0x1]
    %v236 = vlaneseq
    %v237 = vshrl.u32 %v236, 7
    %v238 = vsub.s32 0, %v237
    %v239 = vrot.slane %v234, %v238
    %241 = vmatprep.subr.mxu0 0.0
    %242 = vmatpush1.msra.mxu0 %v218
    %243 = vmatprep.subr.mxu0 0.0
    %244 = vmatpush1.msra.mxu0 %v219
    %245 = vmatprep.subr.mxu0 0.0
    %246 = vmatpush1.msra.mxu0 %v220
    %247 = vmatprep.subr.mxu0 0.0
    %248 = vmatpush1.msra.mxu0 %v221
    %249 = vmatprep.subr.mxu0 0.0
    %250 = vmatpush1.msra.mxu0 %v222
    %251 = vmatprep.subr.mxu0 0.0
    %252 = vmatpush1.msra.mxu0 %v223
    %253 = vmatprep.subr.mxu0 0.0
    %254 = vmatpush1.msra.mxu0 %v224
    %255 = vmatprep.subr.mxu0 0.0
    %256 = vmatpush1.msra.mxu0 %v225
    %257 = vmatprep.subr.mxu0 0.0
    %258 = vmatpush1.msra.mxu0 %v226
    %259 = vmatprep.subr.mxu0 0.0
    %260 = vmatpush1.msra.mxu0 %v227
    %261 = vmatprep.subr.mxu0 0.0
    %262 = vmatpush1.msra.mxu0 %v228
    %263 = vmatprep.subr.mxu0 0.0
    %264 = vmatpush1.msra.mxu0 %v229
    %265 = vmatprep.subr.mxu0 0.0
    %266 = vmatpush1.msra.mxu0 %v230
    %267 = vmatprep.subr.mxu0 0.0
    %268 = vmatpush1.msra.mxu0 %v231
    %269 = vmatprep.subr.mxu0 0.0
    %270 = vmatpush1.msra.mxu0 %v232
    %271 = vmatprep.subr.mxu0 0.0
    %272 = vmatpush1.msra.mxu0 %v233
    %273 = vmatprep.subr.mxu0 0.0
    %274 = vmatpush1.msra.mxu0 0.0
    %275 = vmatprep.subr.mxu0 0.0
    %276 = vmatpush1.msra.mxu0 0.0
    %277 = vmatprep.subr.mxu0 0.0
    %278 = vmatpush1.msra.mxu0 0.0
    %279 = vmatprep.subr.mxu0 0.0
    %280 = vmatpush1.msra.mxu0 0.0
    %281 = vmatprep.subr.mxu0 0.0
    %282 = vmatpush1.msra.mxu0 0.0
    %283 = vmatprep.subr.mxu0 0.0
    %284 = vmatpush1.msra.mxu0 0.0
    %285 = vmatprep.subr.mxu0 0.0
    %286 = vmatpush1.msra.mxu0 0.0
    %287 = vmatprep.subr.mxu0 0.0
    %288 = vmatpush1.msra.mxu0 0.0
    %289 = vmatprep.subr.mxu0 0.0
    %290 = vmatpush1.msra.mxu0 0.0
    %291 = vmatprep.subr.mxu0 0.0
    %292 = vmatpush1.msra.mxu0 0.0
    %293 = vmatprep.subr.mxu0 0.0
    %294 = vmatpush1.msra.mxu0 0.0
    %295 = vmatprep.subr.mxu0 0.0
    %296 = vmatpush1.msra.mxu0 0.0
    %297 = vmatprep.subr.mxu0 0.0
    %298 = vmatpush1.msra.mxu0 0.0
    %299 = vmatprep.subr.mxu0 0.0
    %300 = vmatpush1.msra.mxu0 0.0
    %301 = vmatprep.subr.mxu0 0.0
    %302 = vmatpush1.msra.mxu0 0.0
    %303 = vmatprep.subr.mxu0 0.0
    %304 = vmatpush1.msra.mxu0 0.0
    %305 = vmatprep.mubr.f32.mxu0 0.0
    %306 = vmatmul.mubr.f32.gmra.mrb[0].mxu0 %v217
    %v307 = vpop.f32.mrb[0].mxu0
    %v308 = vadd.f32 %v239, %v307
    %v309 = vpop.f32.mrb[0].mxu0
    %310 = vdwg.mxu0
    %vm311 = vcmask 64512
    %312 = vst.msk [vmem:[#allocation5] sm:$0xff] %vm311, %v308
    // Predicated region
    $region34: #{tpu_custom_call.1} parent=1 // pred_check
      _
    $region35: #{tpu_custom_call.1} parent=1 // pred_check_branch
      %314 = sbr.rel (0) target = $region37
    $region36: #{tpu_custom_call.1} parent=1 // pred_region
      %s316 = ssub.s32 128, 128
      %317 = vsyncadd [#allocation4], %s316
      %s319 = sshll.u32 [#allocation5], 4
      %s320 = int_to_ptr.vmem [resolvable:$true] %s319
      %322 = dma.vmem_to_hbm [thread:$0]  %s320, 128, %s7, [#allocation4]
    $region37: #{tpu_custom_call.1} parent=1 // pred_fallthru
      _
    // Predicated region
    $region38: #{tpu_custom_call.1} parent=1 // pred_check
      _
    $region39: #{tpu_custom_call.1} parent=1 // pred_check_branch
      %324 = sbr.rel (0) target = $region41
    $region40: #{tpu_custom_call.1} parent=1 // pred_region
      %325 = dma.done [#allocation4], 128
    $region41: #{tpu_custom_call.1} parent=1 // pred_fallthru
      _
    %326 = vsyncpa [#allocation3], 1
    %327 = vsyncpa [#allocation4], 1

</llo_original>
